<compile_context>
chip_gen: v7x
topology: tpu7x:2x2x1
jax: 0.10.0
libtpu: 0.0.40
codegen_flags: <defaults>
</compile_context>

<pallas_src>
import functools

import jax
import jax.numpy as jnp
from jax import lax
from jax.experimental import pallas as pl
from jax.experimental.pallas import tpu as pltpu

EPS = 1e-5  # nn.BatchNorm2d default eps


def _conv_bn_relu_kernel(w_ref, gb_ref, p_ref, o_ref):
    # w_ref : (Cout, CKK)    flattened conv weight
    # gb_ref: (Cout, 2)      column 0 = gamma, column 1 = beta
    # p_ref : (CKK, B*HW)    im2col patches for the whole batch (lane-dense)
    # o_ref : (Cout, B*HW)
    n = float(p_ref.shape[1])

    # One MXU matmul over the whole batch.
    y = jnp.dot(w_ref[...], p_ref[...], preferred_element_type=jnp.float32)

    # BatchNorm2d training-mode batch statistics (biased variance), two-pass
    # for numerical robustness (mean subtracted before squaring).
    mean = jnp.sum(y, axis=1, keepdims=True) / n            # (Cout, 1)
    yc = y - mean
    var = jnp.sum(yc * yc, axis=1, keepdims=True) / n       # (Cout, 1)

    scale = gb_ref[:, 0:1] * lax.rsqrt(var + EPS)            # gamma / sqrt(var+eps)
    shift = gb_ref[:, 1:2]                                   # beta (mean already removed)

    o_ref[...] = jnp.maximum(yc * scale + shift, 0.0)


@functools.partial(jax.jit, static_argnames=("kernel_size", "padding", "stride"))
def conv_batch_relu(x, weight, gamma, beta, *, kernel_size, padding=0, stride=1):
    """Forward pass of ConvBatchRelu (Conv2d -> BatchNorm2d(train) -> ReLU).

    x:      (B, Cin, H, W)     float32, NCHW
    weight: (Cout, Cin, K, K)  PyTorch Conv2d layout (cross-correlation, no flip)
    gamma:  (Cout,)            BatchNorm2d affine weight
    beta:   (Cout,)            BatchNorm2d affine bias
    returns (B, Cout, Ho, Wo)

    The Conv2d bias is intentionally not an argument: under TRAIN-mode
    BatchNorm the per-channel constant cancels exactly (it would NOT cancel
    under eval-mode BN with running statistics).
    """
    B, Cin, H, W = x.shape
    K = kernel_size
    Cout = weight.shape[0]
    s, p = stride, padding
    Ho = (H + 2 * p - K) // s + 1
    Wo = (W + 2 * p - K) // s + 1
    CKK = Cin * K * K
    HW = Ho * Wo
    N = B * HW

    # ---- wrapper glue: single fused im2col HLO ----
    # Output channel ordering of conv_general_dilated_patches is
    # (ci slowest, kh, kw fastest) == weight.reshape(Cout, Cin*K*K) ordering.
    patches = lax.conv_general_dilated_patches(
        x, filter_shape=(K, K), window_strides=(s, s),
        padding=((p, p), (p, p)),
        dimension_numbers=("NCHW", "OIHW", "NCHW"))          # (B, CKK, Ho, Wo)
    patches = patches.reshape(B, CKK, HW)
    patches = jnp.transpose(patches, (1, 0, 2)).reshape(CKK, N)   # (CKK, B*HW)

    w_flat = weight.reshape(Cout, CKK).astype(jnp.float32)        # (Cout, CKK)
    gb = jnp.stack([gamma, beta], axis=1).astype(jnp.float32)     # (Cout, 2)

    cost = pl.CostEstimate(
        flops=2 * Cout * CKK * N + 6 * Cout * N,
        transcendentals=Cout,
        bytes_accessed=4 * (CKK * N + Cout * CKK + 2 * Cout + Cout * N),
    )

    # ---- Pallas hot path: one matmul + batch-norm (batch stats) + relu ----
    out_flat = pl.pallas_call(
        _conv_bn_relu_kernel,
        out_shape=jax.ShapeDtypeStruct((Cout, N), jnp.float32),
        grid=(1,),
        in_specs=[
            pl.BlockSpec((Cout, CKK), lambda i: (0, 0)),   # weight
            pl.BlockSpec((Cout, 2), lambda i: (0, 0)),     # gamma|beta
            pl.BlockSpec((CKK, N), lambda i: (0, 0)),      # whole-batch patches
        ],
        out_specs=pl.BlockSpec((Cout, N), lambda i: (0, 0)),
        compiler_params=pltpu.CompilerParams(
            dimension_semantics=("arbitrary",)),
        cost_estimate=cost,
    )(w_flat, gb, patches)

    # TODO(synk): BatchNorm2d running_mean/running_var buffer updates (training
    # side effect) are not modeled; forward output uses batch stats as in
    # PyTorch train mode.
    out = out_flat.reshape(Cout, B, Ho, Wo)
    return jnp.transpose(out, (1, 0, 2, 3))


def _reference(x, weight, conv_bias, gamma, beta, *, kernel_size, padding, stride):
    """Pure-JAX reference: Conv2d (with bias) -> BatchNorm2d(train) -> ReLU."""
    y = lax.conv_general_dilated(
        x, weight, window_strides=(stride, stride),
        padding=((padding, padding), (padding, padding)),
        dimension_numbers=("NCHW", "OIHW", "NCHW"))
    y = y + conv_bias[None, :, None, None]   # kept to show it cancels under train-BN
    mean = jnp.mean(y, axis=(0, 2, 3), keepdims=True)
    var = jnp.mean((y - mean) ** 2, axis=(0, 2, 3), keepdims=True)  # biased var
    y = (y - mean) * lax.rsqrt(var + EPS)
    y = y * gamma[None, :, None, None] + beta[None, :, None, None]
    return jnp.maximum(y, 0.0)


if __name__ == "__main__":
    # module config: in_channels=4, out_channels=8, kernel_size=3, padding=1, stride=1
    B, Cin, H, W = 2, 4, 16, 16
    Cout, K, PAD, STRIDE = 8, 3, 1, 1

    key = jax.random.PRNGKey(0)
    kx, kw, kb, kg, kbe = jax.random.split(key, 5)
    x = jax.random.normal(kx, (B, Cin, H, W), dtype=jnp.float32)
    weight = jax.random.normal(kw, (Cout, Cin, K, K), dtype=jnp.float32) * 0.1
    conv_bias = jax.random.normal(kb, (Cout,), dtype=jnp.float32) * 0.1  # cancels under BN
    gamma = 1.0 + 0.1 * jax.random.normal(kg, (Cout,), dtype=jnp.float32)
    beta = 0.1 * jax.random.normal(kbe, (Cout,), dtype=jnp.float32)

    out = conv_batch_relu(x, weight, gamma, beta,
                          kernel_size=K, padding=PAD, stride=STRIDE)
    out = jax.block_until_ready(out)

    ref = _reference(x, weight, conv_bias, gamma, beta,
                     kernel_size=K, padding=PAD, stride=STRIDE)
    ref = jax.block_until_ready(ref)

    assert out.shape == (B, Cout, H, W), out.shape
    assert jnp.allclose(out, ref, atol=1e-4, rtol=1e-4), \
        float(jnp.max(jnp.abs(out - ref)))

    print("KERNEL_OK")
</pallas_src>

<mosaic_0001>
module attributes {stable_mosaic.version = 11 : i64} {
  func.func @_conv_bn_relu_kernel(%arg0: i32, %arg1: memref<8x36xf32, #tpu.memory_space<vmem>>, %arg2: memref<8x2xf32, #tpu.memory_space<vmem>>, %arg3: memref<36x512xf32, #tpu.memory_space<vmem>>, %arg4: memref<8x512xf32, #tpu.memory_space<vmem>>) attributes {dimension_semantics = [#tpu.dimension_semantics<arbitrary>], iteration_bounds = array<i64: 1>, scalar_prefetch = 0 : i64, scratch_operands = 0 : i64, tpu.core_type = #tpu.core_type<tc>, window_params = [{pipeline_mode = #tpu.pipeline_mode<synchronous>, transform_indices = @transform_0, window_bounds = array<i64: 8, 36>}, {pipeline_mode = #tpu.pipeline_mode<synchronous>, transform_indices = @transform_1, window_bounds = array<i64: 8, 2>}, {pipeline_mode = #tpu.pipeline_mode<synchronous>, transform_indices = @transform_2, window_bounds = array<i64: 36, 512>}, {pipeline_mode = #tpu.pipeline_mode<synchronous>, transform_indices = @transform_3, window_bounds = array<i64: 8, 512>}]} {
    %c0 = arith.constant 0 : index
    %c0_0 = arith.constant 0 : index
    %0 = vector.load %arg1[%c0, %c0_0] : memref<8x36xf32, #tpu.memory_space<vmem>>, vector<8x36xf32>
    %c0_1 = arith.constant 0 : index
    %c0_2 = arith.constant 0 : index
    %1 = vector.load %arg3[%c0_1, %c0_2] : memref<36x512xf32, #tpu.memory_space<vmem>>, vector<36x512xf32>
    %cst = arith.constant dense<0.000000e+00> : vector<8x512xf32>
    %2 = tpu.matmul %0, %1, %cst {dimension_numbers = #tpu.dot_dimension_numbers<[1], [0], [0], [1], [0, 0, 1, 1], [], []>} : vector<8x36xf32>, vector<36x512xf32>, vector<8x512xf32> -> vector<8x512xf32>
    %cst_3 = arith.constant dense<0.000000e+00> : vector<8xf32>
    %3 = vector.multi_reduction <add>, %2, %cst_3 [1] : vector<8x512xf32> to vector<8xf32>
    %4 = vector.shape_cast %3 : vector<8xf32> to vector<8x1xf32>
    %cst_4 = arith.constant 5.120000e+02 : f32
    %5 = vector.broadcast %cst_4 : f32 to vector<8x1xf32>
    %6 = arith.divf %4, %5 : vector<8x1xf32>
    %7 = vector.broadcast %6 : vector<8x1xf32> to vector<8x512xf32>
    %8 = arith.subf %2, %7 : vector<8x512xf32>
    %9 = arith.mulf %8, %8 : vector<8x512xf32>
    %cst_5 = arith.constant dense<0.000000e+00> : vector<8xf32>
    %10 = vector.multi_reduction <add>, %9, %cst_5 [1] : vector<8x512xf32> to vector<8xf32>
    %11 = vector.shape_cast %10 : vector<8xf32> to vector<8x1xf32>
    %cst_6 = arith.constant 5.120000e+02 : f32
    %12 = vector.broadcast %cst_6 : f32 to vector<8x1xf32>
    %13 = arith.divf %11, %12 : vector<8x1xf32>
    %c0_7 = arith.constant 0 : index
    %c0_8 = arith.constant 0 : index
    %14 = vector.load %arg2[%c0_7, %c0_8] : memref<8x2xf32, #tpu.memory_space<vmem>>, vector<8x1xf32>
    %cst_9 = arith.constant 9.99999974E-6 : f32
    %15 = vector.broadcast %cst_9 : f32 to vector<8x1xf32>
    %16 = arith.addf %13, %15 : vector<8x1xf32>
    %17 = math.rsqrt %16 : vector<8x1xf32>
    %18 = arith.mulf %14, %17 : vector<8x1xf32>
    %c0_10 = arith.constant 0 : index
    %c1 = arith.constant 1 : index
    %19 = vector.load %arg2[%c0_10, %c1] : memref<8x2xf32, #tpu.memory_space<vmem>>, vector<8x1xf32>
    %20 = vector.broadcast %18 : vector<8x1xf32> to vector<8x512xf32>
    %21 = arith.mulf %8, %20 : vector<8x512xf32>
    %22 = vector.broadcast %19 : vector<8x1xf32> to vector<8x512xf32>
    %23 = arith.addf %21, %22 : vector<8x512xf32>
    %cst_11 = arith.constant 0.000000e+00 : f32
    %24 = vector.broadcast %cst_11 : f32 to vector<8x512xf32>
    %25 = arith.maximumf %23, %24 : vector<8x512xf32>
    %c0_12 = arith.constant 0 : index
    %c0_13 = arith.constant 0 : index
    %26 = vector.load %arg4[%c0_12, %c0_13] : memref<8x512xf32, #tpu.memory_space<vmem>>, vector<8x512xf32>
    tpu.vector_store %arg4[%c0_12, %c0_13], %25 {strides = array<i32>} : memref<8x512xf32, #tpu.memory_space<vmem>>, vector<8x512xf32>,
    return
  }
  func.func @transform_0(%arg0: i32) -> (i32, i32) {
    %c0_i32 = arith.constant 0 : i32
    %c0_i32_0 = arith.constant 0 : i32
    %c0_i32_1 = arith.constant 0 : i32
    return %c0_i32, %c0_i32_0 : i32, i32
  }
  func.func @transform_1(%arg0: i32) -> (i32, i32) {
    %c0_i32 = arith.constant 0 : i32
    %c0_i32_0 = arith.constant 0 : i32
    %c0_i32_1 = arith.constant 0 : i32
    return %c0_i32, %c0_i32_0 : i32, i32
  }
  func.func @transform_2(%arg0: i32) -> (i32, i32) {
    %c0_i32 = arith.constant 0 : i32
    %c0_i32_0 = arith.constant 0 : i32
    %c0_i32_1 = arith.constant 0 : i32
    return %c0_i32, %c0_i32_0 : i32, i32
  }
  func.func @transform_3(%arg0: i32) -> (i32, i32) {
    %c0_i32 = arith.constant 0 : i32
    %c0_i32_0 = arith.constant 0 : i32
    %c0_i32_1 = arith.constant 0 : i32
    return %c0_i32, %c0_i32_0 : i32, i32
  }
}

</mosaic_0001>

<llo_original>
// kernel: conv_batch_relu.1
$region0: #{conv_batch_relu.1}
  #allocation0 [shape = 'u32[]', space=smem, size = 0x4, offset = 0x4, fixed_abs, tag = 'smem constant byte address 0x4 - core index']
  #allocation1 [shape = 'u32[144,128]{1,0:T(1,128)}', space=vmem, size = 0x12000, scoped, tag = 'internal scratch']
  %s0 = inlined_call_operand.vmem [shape: f32[8,36], index: 0, kind: input, shape index: {}]
  %s1 = inlined_call_operand.vmem [shape: f32[8,2], index: 1, kind: input, shape index: {}]
  %s2 = inlined_call_operand.vmem [shape: f32[36,512], index: 2, kind: input, shape index: {}]
  %s3 = inlined_call_operand.vmem [shape: f32[8,512], index: 3, kind: output, shape index: {}]
  %s4 = sld [smem:[#allocation0]]
  $region22: #{conv_batch_relu.1} parent=0
    _
  %s6 = ssub.s32 1, %s4
  %s7 = scalar_select 0, %s6, %s4
  // Predicated region
  $region2: #{conv_batch_relu.1} parent=0 // pred_check
    _
  $region3: #{conv_batch_relu.1} parent=0 // pred_check_branch
    %9 = sbr.rel (0) target = $region5
  $region4: #{conv_batch_relu.1} parent=0 // pred_region
    _
  $region5: #{conv_batch_relu.1} parent=0 // pred_fallthru
    _
  // Predicated region
  $region6: #{conv_batch_relu.1} parent=0 // pred_check
    _
  $region7: #{conv_batch_relu.1} parent=0 // pred_check_branch
    %11 = sbr.rel (0) target = $region9
  $region8: #{conv_batch_relu.1} parent=0 // pred_region
    _
  $region9: #{conv_batch_relu.1} parent=0 // pred_fallthru
    _
  // Predicated region
  $region10: #{conv_batch_relu.1} parent=0 // pred_check
    _
  $region11: #{conv_batch_relu.1} parent=0 // pred_check_branch
    %13 = sbr.rel (0) target = $region13
  $region12: #{conv_batch_relu.1} parent=0 // pred_region
    _
  $region13: #{conv_batch_relu.1} parent=0 // pred_fallthru
    _
  %v14 = vld [vmem:[%s0] sm:$0xff]
  %v15 = vld [vmem:[%s2] sm:$0xff]
  %v16 = vld [vmem:[%s2 + $0x8] sm:$0xff]
  %v17 = vld [vmem:[%s2 + $0x10] sm:$0xff]
  %v18 = vld [vmem:[%s2 + $0x18] sm:$0xff]
  %v19 = vld [vmem:[%s2 + $0x20] sm:$0xff]
  %v20 = vld [vmem:[%s2 + $0x28] sm:$0xff]
  %v21 = vld [vmem:[%s2 + $0x30] sm:$0xff]
  %v22 = vld [vmem:[%s2 + $0x38] sm:$0xff]
  %v23 = vld [vmem:[%s2 + $0x40] sm:$0xff]
  %v24 = vld [vmem:[%s2 + $0x48] sm:$0xff]
  %v25 = vld [vmem:[%s2 + $0x50] sm:$0xff]
  %v26 = vld [vmem:[%s2 + $0x58] sm:$0xff]
  %v27 = vld [vmem:[%s2 + $0x60] sm:$0xff]
  %v28 = vld [vmem:[%s2 + $0x68] sm:$0xff]
  %v29 = vld [vmem:[%s2 + $0x70] sm:$0xff]
  %v30 = vld [vmem:[%s2 + $0x78] sm:$0xff]
  %v31 = vld [vmem:[%s2 + $0x80] sm:$0xf]
  %v32 = vld [vmem:[%s2 + $0x88] sm:$0xf]
  %v33 = vld [vmem:[%s2 + $0x90] sm:$0xf]
  %v34 = vld [vmem:[%s2 + $0x98] sm:$0xf]
  %vm35 = vcmask 293888
  %v37 = vsel %vm35, %v14, 0
  %vm39 = vcmask 1043456
  %v41 = vsel %vm39, %v31, 0
  %v44 = vsel %vm39, %v32, 0
  %v47 = vsel %vm39, %v33, 0
  %v50 = vsel %vm39, %v34, 0
  %52 = vmatprep.subr.mxu0 %v16
  %53 = vmatpush1.msra.mxu0 %v15
  %54 = vmatprep.subr.mxu0 %v20
  %55 = vmatpush1.msra.mxu0 %v19
  %56 = vmatprep.subr.mxu0 %v24
  %57 = vmatpush1.msra.mxu0 %v23
  %58 = vmatprep.subr.mxu0 %v28
  %59 = vmatpush1.msra.mxu0 %v27
  %60 = vmatprep.subr.mxu0 %v44
  %61 = vmatpush1.msra.mxu0 %v41
  %62 = vmatprep.subr.mxu0 0.0
  %63 = vmatpush1.msra.mxu0 0.0
  %64 = vmatprep.subr.mxu0 0.0
  %65 = vmatpush1.msra.mxu0 0.0
  %66 = vmatprep.subr.mxu0 0.0
  %67 = vmatpush1.msra.mxu0 0.0
  %68 = vmatprep.subr.mxu0 0.0
  %69 = vmatpush1.msra.mxu0 0.0
  %70 = vmatprep.subr.mxu0 0.0
  %71 = vmatpush1.msra.mxu0 0.0
  %72 = vmatprep.subr.mxu0 0.0
  %73 = vmatpush1.msra.mxu0 0.0
  %74 = vmatprep.subr.mxu0 0.0
  %75 = vmatpush1.msra.mxu0 0.0
  %76 = vmatprep.subr.mxu0 0.0
  %77 = vmatpush1.msra.mxu0 0.0
  %78 = vmatprep.subr.mxu0 0.0
  %79 = vmatpush1.msra.mxu0 0.0
  %80 = vmatprep.subr.mxu0 0.0
  %81 = vmatpush1.msra.mxu0 0.0
  %82 = vmatprep.subr.mxu0 0.0
  %83 = vmatpush1.msra.mxu0 0.0
  %84 = vmatprep.subr.mxu0 0.0
  %85 = vmatpush1.msra.mxu0 0.0
  %86 = vmatprep.subr.mxu0 0.0
  %87 = vmatpush1.msra.mxu0 0.0
  %88 = vmatprep.subr.mxu0 0.0
  %89 = vmatpush1.msra.mxu0 0.0
  %90 = vmatprep.subr.mxu0 0.0
  %91 = vmatpush1.msra.mxu0 0.0
  %92 = vmatprep.subr.mxu0 0.0
  %93 = vmatpush1.msra.mxu0 0.0
  %94 = vmatprep.subr.mxu0 0.0
  %95 = vmatpush1.msra.mxu0 0.0
  %96 = vmatprep.subr.mxu0 0.0
  %97 = vmatpush1.msra.mxu0 0.0
  %98 = vmatprep.subr.mxu0 0.0
  %99 = vmatpush1.msra.mxu0 0.0
  %100 = vmatprep.subr.mxu0 0.0
  %101 = vmatpush1.msra.mxu0 0.0
  %102 = vmatprep.subr.mxu0 0.0
  %103 = vmatpush1.msra.mxu0 0.0
  %104 = vmatprep.subr.mxu0 0.0
  %105 = vmatpush1.msra.mxu0 0.0
  %106 = vmatprep.subr.mxu0 0.0
  %107 = vmatpush1.msra.mxu0 0.0
  %108 = vmatprep.subr.mxu0 0.0
  %109 = vmatpush1.msra.mxu0 0.0
  %110 = vmatprep.subr.mxu0 0.0
  %111 = vmatpush1.msra.mxu0 0.0
  %112 = vmatprep.subr.mxu0 0.0
  %113 = vmatpush1.msra.mxu0 0.0
  %114 = vmatprep.subr.mxu0 0.0
  %115 = vmatpush1.msra.mxu0 0.0
  %116 = vmatprep.mubr.f32.mxu0 0.0
  %117 = vmatmul.mubr.f32.gmra.mrb[0].mxu0 %v37
  %v118 = vpop.f32.mrb[0].mxu0
  %v119 = vadd.f32 0.0, %v118
  %v120 = vpop.f32.mrb[0].mxu0
  %v121 = vadd.f32 0.0, %v120
  %122 = vdwg.mxu0
  %123 = vmatprep.subr.mxu0 %v18
  %124 = vmatpush1.msra.mxu0 %v17
  %125 = vmatprep.subr.mxu0 %v22
  %126 = vmatpush1.msra.mxu0 %v21
  %127 = vmatprep.subr.mxu0 %v26
  %128 = vmatpush1.msra.mxu0 %v25
  %129 = vmatprep.subr.mxu0 %v30
  %130 = vmatpush1.msra.mxu0 %v29
  %131 = vmatprep.subr.mxu0 %v50
  %132 = vmatpush1.msra.mxu0 %v47
  %133 = vmatprep.subr.mxu0 0.0
  %134 = vmatpush1.msra.mxu0 0.0
  %135 = vmatprep.subr.mxu0 0.0
  %136 = vmatpush1.msra.mxu0 0.0
  %137 = vmatprep.subr.mxu0 0.0
  %138 = vmatpush1.msra.mxu0 0.0
  %139 = vmatprep.subr.mxu0 0.0
  %140 = vmatpush1.msra.mxu0 0.0
  %141 = vmatprep.subr.mxu0 0.0
  %142 = vmatpush1.msra.mxu0 0.0
  %143 = vmatprep.subr.mxu0 0.0
  %144 = vmatpush1.msra.mxu0 0.0
  %145 = vmatprep.subr.mxu0 0.0
  %146 = vmatpush1.msra.mxu0 0.0
  %147 = vmatprep.subr.mxu0 0.0
  %148 = vmatpush1.msra.mxu0 0.0
  %149 = vmatprep.subr.mxu0 0.0
  %150 = vmatpush1.msra.mxu0 0.0
  %151 = vmatprep.subr.mxu0 0.0
  %152 = vmatpush1.msra.mxu0 0.0
  %153 = vmatprep.subr.mxu0 0.0
  %154 = vmatpush1.msra.mxu0 0.0
  %155 = vmatprep.subr.mxu0 0.0
  %156 = vmatpush1.msra.mxu0 0.0
  %157 = vmatprep.subr.mxu0 0.0
  %158 = vmatpush1.msra.mxu0 0.0
  %159 = vmatprep.subr.mxu0 0.0
  %160 = vmatpush1.msra.mxu0 0.0
  %161 = vmatprep.subr.mxu0 0.0
  %162 = vmatpush1.msra.mxu0 0.0
  %163 = vmatprep.subr.mxu0 0.0
  %164 = vmatpush1.msra.mxu0 0.0
  %165 = vmatprep.subr.mxu0 0.0
  %166 = vmatpush1.msra.mxu0 0.0
  %167 = vmatprep.subr.mxu0 0.0
  %168 = vmatpush1.msra.mxu0 0.0
  %169 = vmatprep.subr.mxu0 0.0
  %170 = vmatpush1.msra.mxu0 0.0
  %171 = vmatprep.subr.mxu0 0.0
  %172 = vmatpush1.msra.mxu0 0.0
  %173 = vmatprep.subr.mxu0 0.0
  %174 = vmatpush1.msra.mxu0 0.0
  %175 = vmatprep.subr.mxu0 0.0
  %176 = vmatpush1.msra.mxu0 0.0
  %177 = vmatprep.subr.mxu0 0.0
  %178 = vmatpush1.msra.mxu0 0.0
  %179 = vmatprep.subr.mxu0 0.0
  %180 = vmatpush1.msra.mxu0 0.0
  %181 = vmatprep.subr.mxu0 0.0
  %182 = vmatpush1.msra.mxu0 0.0
  %183 = vmatprep.subr.mxu0 0.0
  %184 = vmatpush1.msra.mxu0 0.0
  %185 = vmatprep.subr.mxu0 0.0
  %186 = vmatpush1.msra.mxu0 0.0
  %187 = vmatprep.mubr.f32.mxu0 0.0
  %188 = vmatmul.mubr.f32.gmra.mrb[0].mxu0 %v37
  %v189 = vpop.f32.mrb[0].mxu0
  %v190 = vadd.f32 0.0, %v189
  %v191 = vpop.f32.mrb[0].mxu0
  %v192 = vadd.f32 0.0, %v191
  %193 = vdwg.mxu0
  %v194 = vadd.f32 %v119, %v121
  %v195 = vadd.f32 %v194, %v190
  %v196 = vadd.f32 %v195, %v192
  %197 = vadd.xlane.f32.xlu0 %v196
  %v198 = vpop.xlane.xlu0 %197
  %v199 = vrcp.pop 512.0
  %v200 = vmul.f32 %v198, %v199
  %v201 = vsub.f32 %v119, %v200
  %v202 = vsub.f32 %v121, %v200
  %v203 = vsub.f32 %v190, %v200
  %v204 = vsub.f32 %v192, %v200
  %v205 = vmul.f32 %v201, %v201
  %v206 = vmul.f32 %v202, %v202
  %v207 = vmul.f32 %v203, %v203
  %v208 = vmul.f32 %v204, %v204
  %v209 = vadd.f32 %v205, %v206
  %v210 = vadd.f32 %v209, %v207
  %v211 = vadd.f32 %v210, %v208
  %212 = vadd.xlane.f32.xlu0 %v211
  %v213 = vpop.xlane.xlu0 %212
  %v214 = vmul.f32 %v213, %v199
  %v215 = vld [vmem:[%s1] sm:$0xff]
  %v216 = vadd.f32 %v214, 1e-05
  %v217 = vrsqrt.pop %v216
  %v218 = vmul.f32 %v215, %v217
  %220 = vset.pattern.permute.xlu0 0
  %221 = vperm.xlu0 %220, %v218
  %v222 = vpop.permute.xlu0 %221
  %v224 = vmul.f32 %v201, %v222
  %v225 = vmul.f32 %v202, %v222
  %v226 = vmul.f32 %v203, %v222
  %v227 = vmul.f32 %v204, %v222
  %229 = vset.pattern.permute.xlu0 1
  %230 = vperm.xlu0 %229, %v215
  %v231 = vpop.permute.xlu0 %230
  %v233 = vadd.f32 %v224, %v231
  %v234 = vadd.f32 %v225, %v231
  %v235 = vadd.f32 %v226, %v231
  %v236 = vadd.f32 %v227, %v231
  %v237 = vmax.f32 %v233, 0.0
  %v238 = vmax.f32 %v234, 0.0
  %v239 = vmax.f32 %v235, 0.0
  %v240 = vmax.f32 %v236, 0.0
  %241 = vst [vmem:[%s3] sm:$0xff] %v237
  %242 = vst [vmem:[%s3 + $0x8] sm:$0xff] %v238
  %243 = vst [vmem:[%s3 + $0x10] sm:$0xff] %v239
  %244 = vst [vmem:[%s3 + $0x18] sm:$0xff] %v240
  // Predicated region
  $region14: #{conv_batch_relu.1} parent=0 // pred_check
    _
  $region15: #{conv_batch_relu.1} parent=0 // pred_check_branch
    %246 = sbr.rel (0) target = $region17
  $region16: #{conv_batch_relu.1} parent=0 // pred_region
    _
  $region17: #{conv_batch_relu.1} parent=0 // pred_fallthru
    _
  // Predicated region
  $region18: #{conv_batch_relu.1} parent=0 // pred_check
    _
  $region19: #{conv_batch_relu.1} parent=0 // pred_check_branch
    %248 = sbr.rel (0) target = $region21
  $region20: #{conv_batch_relu.1} parent=0 // pred_region
    _
  $region21: #{conv_batch_relu.1} parent=0 // pred_fallthru
    _

</llo_original>
